<compile_context>
chip_gen: v7x
topology: tpu7x:2x2x1
jax: 0.10.0
libtpu: 0.0.40
codegen_flags: <defaults>
</compile_context>

<pallas_src>
import functools

import jax
import jax.numpy as jnp
from jax.experimental import pallas as pl
from jax.experimental.pallas import tpu as pltpu

LANES = 128
MAX_TILE_ROWS = 2048  # (2048, 128) f32 tile = 1 MiB per input per grid step


def _round_up(x, m):
    return (x + m - 1) // m * m


def _bce_dice_kernel(pred_ref, truth_ref, acc_ref, *, tile_rows):
    """Accumulates [tp, sum_pred, sum_truth, +bce] partials into acc_ref.

    pred_ref/truth_ref: (tile_rows, 128) input tiles.
    acc_ref:            (1, 4, 8, 128) VMEM accumulator (resident across the
                        inner grid axis; one slab per "parallel" block).
    """
    i = pl.program_id(1)  # inner (reduction) axis

    @pl.when(i == 0)
    def _init():
        acc_ref[...] = jnp.zeros_like(acc_ref)

    p = pred_ref[...].astype(jnp.float32)
    t = truth_ref[...].astype(jnp.float32)

    one_minus_t = 1.0 - t
    pt = p * t

    # nn.BCELoss clamps each log term at -100 (PyTorch semantics).
    # Two logs are kept so soft labels behave exactly like nn.BCELoss; for
    # hard {0,1} masks a single select-before-log would halve EUP work.
    log_p = jnp.maximum(jnp.log(p), -100.0)
    log_1mp = jnp.maximum(jnp.log(1.0 - p), -100.0)
    bce_pos = t * log_p + one_minus_t * log_1mp  # negated in the wrapper

    def fold(x):
        # (tile_rows, 128) -> (8, 128): sum over the leading vreg-row axis.
        # The reshape keeps every (8, 128) tile intact, so this is pure VPU
        # accumulation (no cross-lane XLU work in the inner loop).
        return jnp.sum(x.reshape(tile_rows // 8, 8, LANES), axis=0)

    acc_ref[0, 0] += fold(pt)        # tp partials
    acc_ref[0, 1] += fold(p)         # sum(pred) partials
    acc_ref[0, 2] += fold(t)         # sum(truth) partials
    acc_ref[0, 3] += fold(bce_pos)   # +BCE partials (sign flipped outside)


def bce_dice_loss(pred, truth, eps=1e-7):
    """Computes BCEDiceLoss.forward(pred, truth) -> scalar f32.

    pred/truth: matching shapes (e.g. NCHW); arbitrary total element count
    (zero-padded internally; padding is exactly neutral).
    """
    assert pred.shape == truth.shape
    total = pred.size
    rows_needed = pl.cdiv(total, LANES)

    if rows_needed <= MAX_TILE_ROWS:
        tile_rows = max(8, _round_up(rows_needed, 8))
        nb, inner = 1, 1
    else:
        tile_rows = MAX_TILE_ROWS
        blocks = pl.cdiv(rows_needed, tile_rows)
        nb = 2 if blocks >= 2 else 1        # megacore split on v7x; harmless elsewhere
        inner = pl.cdiv(blocks, nb)

    rows_padded = nb * inner * tile_rows
    padded_total = rows_padded * LANES

    flat_p = pred.reshape(-1)
    flat_t = truth.reshape(-1)
    if padded_total != total:
        # (p=0, t=0) padding contributes 0 to tp, sum_pred, sum_truth and to
        # the clamped BCE term: 0*max(log 0, -100) + 1*log 1 = 0.
        flat_p = jnp.pad(flat_p, (0, padded_total - total))
        flat_t = jnp.pad(flat_t, (0, padded_total - total))

    pred2d = flat_p.reshape(rows_padded, LANES)
    truth2d = flat_t.reshape(rows_padded, LANES)

    kernel = functools.partial(_bce_dice_kernel, tile_rows=tile_rows)

    partials = pl.pallas_call(
        kernel,
        out_shape=jax.ShapeDtypeStruct((nb, 4, 8, LANES), jnp.float32),
        grid_spec=pltpu.PrefetchScalarGridSpec(
            num_scalar_prefetch=0,
            grid=(nb, inner),
            in_specs=[
                pl.BlockSpec((tile_rows, LANES), lambda b, i: (b * inner + i, 0)),
                pl.BlockSpec((tile_rows, LANES), lambda b, i: (b * inner + i, 0)),
            ],
            out_specs=pl.BlockSpec((1, 4, 8, LANES), lambda b, i: (b, 0, 0, 0)),
        ),
        compiler_params=pltpu.CompilerParams(
            dimension_semantics=("parallel", "arbitrary"),
            vmem_limit_bytes=32 * 1024 * 1024,
        ),
    )(pred2d, truth2d)

    # Tiny cross-block / cross-lane combine + scalar math in plain JAX.
    sums = jnp.sum(partials, axis=(0, 2, 3))  # (4,)
    tp, sum_p, sum_t, bce_pos = sums[0], sums[1], sums[2], sums[3]
    fp = sum_p - tp
    fn = sum_t - tp
    score = (2.0 * tp + eps) / (2.0 * tp + fn + fp + eps)
    dice = 1.0 - score
    bce = -bce_pos / total
    return dice + bce


def _reference(pred, truth, eps=1e-7):
    p = pred.astype(jnp.float32)
    t = truth.astype(jnp.float32)
    tp = jnp.sum(p * t)
    fp = jnp.sum(p) - tp
    fn = jnp.sum(t) - tp
    score = (2 * tp + eps) / (2 * tp + fn + fp + eps)
    dice = 1 - score
    log_p = jnp.maximum(jnp.log(p), -100.0)
    log_1mp = jnp.maximum(jnp.log(1.0 - p), -100.0)
    bce = jnp.mean(-(t * log_p + (1 - t) * log_1mp))
    return dice + bce


if __name__ == "__main__":
    key = jax.random.PRNGKey(0)
    k1, k2 = jax.random.split(key)
    # Example shapes: batch=2, channels=4, spatial=16x16 (NCHW).
    # pred is a post-sigmoid probability map in (0, 1); truth is a binary mask.
    logits = jax.random.normal(k1, (2, 4, 16, 16), dtype=jnp.float32)
    pred = jax.nn.sigmoid(logits)
    truth = (jax.random.uniform(k2, (2, 4, 16, 16)) > 0.5).astype(jnp.float32)

    loss = bce_dice_loss(pred, truth)
    loss = jax.block_until_ready(loss)

    ref = _reference(pred, truth)
    assert jnp.allclose(loss, ref, rtol=1e-5, atol=1e-5), (loss, ref)
    print("KERNEL_OK")
</pallas_src>

<mosaic_0001>
module attributes {stable_mosaic.version = 11 : i64} {
  func.func @_bce_dice_kernel(%arg0: i32, %arg1: i32, %arg2: memref<16x128xf32, #tpu.memory_space<vmem>>, %arg3: memref<16x128xf32, #tpu.memory_space<vmem>>, %arg4: memref<1x4x8x128xf32, #tpu.memory_space<vmem>>) attributes {dimension_semantics = [#tpu.dimension_semantics<parallel>, #tpu.dimension_semantics<arbitrary>], iteration_bounds = array<i64: 1, 1>, scalar_prefetch = 0 : i64, scratch_operands = 0 : i64, tpu.core_type = #tpu.core_type<tc>, window_params = [{transform_indices = @transform_0, window_bounds = array<i64: 16, 128>}, {transform_indices = @transform_1, window_bounds = array<i64: 16, 128>}, {transform_indices = @transform_2, window_bounds = array<i64: 1, 4, 8, 128>}]} {
    %c0_i32 = arith.constant 0 : i32
    %0 = arith.cmpi eq, %arg1, %c0_i32 : i32
    %1 = arith.extui %0 : i1 to i32
    %c0_i32_0 = arith.constant 0 : i32
    %2 = arith.cmpi ne, %1, %c0_i32_0 : i32
    scf.if %2 {
      %cst_40 = arith.constant 0.000000e+00 : f32
      %51 = vector.broadcast %cst_40 : f32 to vector<1x4x8x128xf32>
      %c0_41 = arith.constant 0 : index
      %c0_42 = arith.constant 0 : index
      %c0_43 = arith.constant 0 : index
      %c0_44 = arith.constant 0 : index
      %52 = vector.load %arg4[%c0_41, %c0_42, %c0_43, %c0_44] : memref<1x4x8x128xf32, #tpu.memory_space<vmem>>, vector<1x4x8x128xf32>
      tpu.vector_store %arg4[%c0_41, %c0_42, %c0_43, %c0_44], %51 {strides = array<i32>} : memref<1x4x8x128xf32, #tpu.memory_space<vmem>>, vector<1x4x8x128xf32>,
    } else {
    }
    %c0 = arith.constant 0 : index
    %c0_1 = arith.constant 0 : index
    %3 = vector.load %arg2[%c0, %c0_1] : memref<16x128xf32, #tpu.memory_space<vmem>>, vector<16x128xf32>
    %c0_2 = arith.constant 0 : index
    %c0_3 = arith.constant 0 : index
    %4 = vector.load %arg3[%c0_2, %c0_3] : memref<16x128xf32, #tpu.memory_space<vmem>>, vector<16x128xf32>
    %cst = arith.constant 1.000000e+00 : f32
    %5 = vector.broadcast %cst : f32 to vector<16x128xf32>
    %6 = arith.subf %5, %4 : vector<16x128xf32>
    %7 = arith.mulf %3, %4 : vector<16x128xf32>
    %8 = math.log %3 : vector<16x128xf32>
    %cst_4 = arith.constant -1.000000e+02 : f32
    %9 = vector.broadcast %cst_4 : f32 to vector<16x128xf32>
    %10 = arith.maximumf %8, %9 : vector<16x128xf32>
    %cst_5 = arith.constant 1.000000e+00 : f32
    %11 = vector.broadcast %cst_5 : f32 to vector<16x128xf32>
    %12 = arith.subf %11, %3 : vector<16x128xf32>
    %13 = math.log %12 : vector<16x128xf32>
    %cst_6 = arith.constant -1.000000e+02 : f32
    %14 = vector.broadcast %cst_6 : f32 to vector<16x128xf32>
    %15 = arith.maximumf %13, %14 : vector<16x128xf32>
    %16 = arith.mulf %4, %10 : vector<16x128xf32>
    %17 = arith.mulf %6, %15 : vector<16x128xf32>
    %18 = arith.addf %16, %17 : vector<16x128xf32>
    %c0_7 = arith.constant 0 : index
    %c0_8 = arith.constant 0 : index
    %c0_9 = arith.constant 0 : index
    %c0_10 = arith.constant 0 : index
    %19 = vector.load %arg4[%c0_7, %c0_8, %c0_9, %c0_10] : memref<1x4x8x128xf32, #tpu.memory_space<vmem>>, vector<1x1x8x128xf32>
    %20 = vector.shape_cast %19 : vector<1x1x8x128xf32> to vector<8x128xf32>
    %21 = vector.shape_cast %7 : vector<16x128xf32> to vector<2x8x128xf32>
    %cst_11 = arith.constant dense<0.000000e+00> : vector<8x128xf32>
    %22 = vector.multi_reduction <add>, %21, %cst_11 [0] : vector<2x8x128xf32> to vector<8x128xf32>
    %23 = arith.addf %20, %22 : vector<8x128xf32>
    %c0_12 = arith.constant 0 : index
    %c0_13 = arith.constant 0 : index
    %c0_14 = arith.constant 0 : index
    %c0_15 = arith.constant 0 : index
    %24 = vector.load %arg4[%c0_12, %c0_13, %c0_14, %c0_15] : memref<1x4x8x128xf32, #tpu.memory_space<vmem>>, vector<1x1x8x128xf32>
    %25 = vector.shape_cast %24 : vector<1x1x8x128xf32> to vector<8x128xf32>
    %26 = vector.shape_cast %23 : vector<8x128xf32> to vector<1x1x8x128xf32>
    tpu.vector_store %arg4[%c0_12, %c0_13, %c0_14, %c0_15], %26 {strides = array<i32>} : memref<1x4x8x128xf32, #tpu.memory_space<vmem>>, vector<1x1x8x128xf32>,
    %c0_16 = arith.constant 0 : index
    %c1 = arith.constant 1 : index
    %c0_17 = arith.constant 0 : index
    %c0_18 = arith.constant 0 : index
    %27 = vector.load %arg4[%c0_16, %c1, %c0_17, %c0_18] : memref<1x4x8x128xf32, #tpu.memory_space<vmem>>, vector<1x1x8x128xf32>
    %28 = vector.shape_cast %27 : vector<1x1x8x128xf32> to vector<8x128xf32>
    %29 = vector.shape_cast %3 : vector<16x128xf32> to vector<2x8x128xf32>
    %cst_19 = arith.constant dense<0.000000e+00> : vector<8x128xf32>
    %30 = vector.multi_reduction <add>, %29, %cst_19 [0] : vector<2x8x128xf32> to vector<8x128xf32>
    %31 = arith.addf %28, %30 : vector<8x128xf32>
    %c0_20 = arith.constant 0 : index
    %c1_21 = arith.constant 1 : index
    %c0_22 = arith.constant 0 : index
    %c0_23 = arith.constant 0 : index
    %32 = vector.load %arg4[%c0_20, %c1_21, %c0_22, %c0_23] : memref<1x4x8x128xf32, #tpu.memory_space<vmem>>, vector<1x1x8x128xf32>
    %33 = vector.shape_cast %32 : vector<1x1x8x128xf32> to vector<8x128xf32>
    %34 = vector.shape_cast %31 : vector<8x128xf32> to vector<1x1x8x128xf32>
    tpu.vector_store %arg4[%c0_20, %c1_21, %c0_22, %c0_23], %34 {strides = array<i32>} : memref<1x4x8x128xf32, #tpu.memory_space<vmem>>, vector<1x1x8x128xf32>,
    %c0_24 = arith.constant 0 : index
    %c2 = arith.constant 2 : index
    %c0_25 = arith.constant 0 : index
    %c0_26 = arith.constant 0 : index
    %35 = vector.load %arg4[%c0_24, %c2, %c0_25, %c0_26] : memref<1x4x8x128xf32, #tpu.memory_space<vmem>>, vector<1x1x8x128xf32>
    %36 = vector.shape_cast %35 : vector<1x1x8x128xf32> to vector<8x128xf32>
    %37 = vector.shape_cast %4 : vector<16x128xf32> to vector<2x8x128xf32>
    %cst_27 = arith.constant dense<0.000000e+00> : vector<8x128xf32>
    %38 = vector.multi_reduction <add>, %37, %cst_27 [0] : vector<2x8x128xf32> to vector<8x128xf32>
    %39 = arith.addf %36, %38 : vector<8x128xf32>
    %c0_28 = arith.constant 0 : index
    %c2_29 = arith.constant 2 : index
    %c0_30 = arith.constant 0 : index
    %c0_31 = arith.constant 0 : index
    %40 = vector.load %arg4[%c0_28, %c2_29, %c0_30, %c0_31] : memref<1x4x8x128xf32, #tpu.memory_space<vmem>>, vector<1x1x8x128xf32>
    %41 = vector.shape_cast %40 : vector<1x1x8x128xf32> to vector<8x128xf32>
    %42 = vector.shape_cast %39 : vector<8x128xf32> to vector<1x1x8x128xf32>
    tpu.vector_store %arg4[%c0_28, %c2_29, %c0_30, %c0_31], %42 {strides = array<i32>} : memref<1x4x8x128xf32, #tpu.memory_space<vmem>>, vector<1x1x8x128xf32>,
    %c0_32 = arith.constant 0 : index
    %c3 = arith.constant 3 : index
    %c0_33 = arith.constant 0 : index
    %c0_34 = arith.constant 0 : index
    %43 = vector.load %arg4[%c0_32, %c3, %c0_33, %c0_34] : memref<1x4x8x128xf32, #tpu.memory_space<vmem>>, vector<1x1x8x128xf32>
    %44 = vector.shape_cast %43 : vector<1x1x8x128xf32> to vector<8x128xf32>
    %45 = vector.shape_cast %18 : vector<16x128xf32> to vector<2x8x128xf32>
    %cst_35 = arith.constant dense<0.000000e+00> : vector<8x128xf32>
    %46 = vector.multi_reduction <add>, %45, %cst_35 [0] : vector<2x8x128xf32> to vector<8x128xf32>
    %47 = arith.addf %44, %46 : vector<8x128xf32>
    %c0_36 = arith.constant 0 : index
    %c3_37 = arith.constant 3 : index
    %c0_38 = arith.constant 0 : index
    %c0_39 = arith.constant 0 : index
    %48 = vector.load %arg4[%c0_36, %c3_37, %c0_38, %c0_39] : memref<1x4x8x128xf32, #tpu.memory_space<vmem>>, vector<1x1x8x128xf32>
    %49 = vector.shape_cast %48 : vector<1x1x8x128xf32> to vector<8x128xf32>
    %50 = vector.shape_cast %47 : vector<8x128xf32> to vector<1x1x8x128xf32>
    tpu.vector_store %arg4[%c0_36, %c3_37, %c0_38, %c0_39], %50 {strides = array<i32>} : memref<1x4x8x128xf32, #tpu.memory_space<vmem>>, vector<1x1x8x128xf32>,
    return
  }
  func.func @transform_0(%arg0: i32, %arg1: i32) -> (i32, i32) {
    %c1_i32 = arith.constant 1 : i32
    %0 = arith.muli %arg0, %c1_i32 : i32
    %1 = arith.addi %0, %arg1 : i32
    %c0_i32 = arith.constant 0 : i32
    %c0_i32_0 = arith.constant 0 : i32
    return %1, %c0_i32 : i32, i32
  }
  func.func @transform_1(%arg0: i32, %arg1: i32) -> (i32, i32) {
    %c1_i32 = arith.constant 1 : i32
    %0 = arith.muli %arg0, %c1_i32 : i32
    %1 = arith.addi %0, %arg1 : i32
    %c0_i32 = arith.constant 0 : i32
    %c0_i32_0 = arith.constant 0 : i32
    return %1, %c0_i32 : i32, i32
  }
  func.func @transform_2(%arg0: i32, %arg1: i32) -> (i32, i32, i32, i32) {
    %c0_i32 = arith.constant 0 : i32
    %c0_i32_0 = arith.constant 0 : i32
    %c0_i32_1 = arith.constant 0 : i32
    %c0_i32_2 = arith.constant 0 : i32
    return %arg0, %c0_i32, %c0_i32_0, %c0_i32_1 : i32, i32, i32, i32
  }
}

</mosaic_0001>

<llo_original>
// kernel: tpu_custom_call.1
$region0: #{tpu_custom_call.1}
  #allocation0 [shape = 'u32[]', space=smem, size = 0x4, offset = 0x4, fixed_abs, tag = 'smem constant byte address 0x4 - core index']
  #allocation1 [shape = 'u32[144,128]{1,0:T(1,128)}', space=vmem, size = 0x12000, scoped, tag = 'internal scratch']
  %s0 = inlined_call_operand.hbm [shape: f32[16,128], index: 0, kind: input, shape index: {}]
  %s1 = inlined_call_operand.hbm [shape: f32[16,128], index: 1, kind: input, shape index: {}]
  %s2 = inlined_call_operand.hbm [shape: f32[1,4,8,128], index: 2, kind: output, shape index: {}]
  %s3 = sld [smem:[#allocation0]]
  $region30: #{tpu_custom_call.1} parent=0
    _
  %s5 = ssub.s32 1, %s3
  %s6 = scalar_select 0, %s5, %s3
  $region1: #{tpu_custom_call.1} parent=0
    #allocation2 [shape = 'u8[8192]{0}', space=vmem, size = 0x2000, scoped, tag = 'input window, operand 0, single buffered']
    #allocation3 [shape = 's32[1]{0}', space=sflag, size = 0x4, scoped, tag = 'scoped memory for tpu_custom_call.1']
    #allocation4 [shape = 's32[1]{0}', space=sflag, size = 0x4, scoped, tag = 'scoped memory for tpu_custom_call.1']
    #allocation5 [shape = 'u8[8192]{0}', space=vmem, size = 0x2000, scoped, tag = 'input window, operand 1, single buffered']
    #allocation6 [shape = 's32[1]{0}', space=sflag, size = 0x4, scoped, tag = 'scoped memory for tpu_custom_call.1']
    #allocation7 [shape = 'u8[16384]{0}', space=vmem, size = 0x4000, scoped, tag = 'output window, operand 0, single buffered']
    %7 = vsyncpa [#allocation3], 0
    %8 = vsyncpa [#allocation6], 0
    %9 = vsyncpa [#allocation4], 0
    // Predicated region
    $region2: #{tpu_custom_call.1} parent=1 // pred_check
      _
    $region3: #{tpu_custom_call.1} parent=1 // pred_check_branch
      %11 = sbr.rel (0) target = $region5
    $region4: #{tpu_custom_call.1} parent=1 // pred_region
      %s12 = sadd.s32 0, 0
      %s13 = smul.u32 2, %s12
      %s15 = ssub.s32 256, 256
      %16 = vsyncadd [#allocation3], %s15
      %s17 = smul.addr %s13, 128
      %s18 = scalar_lea.hbm %s0, %s17
      %s19 = sshll.u32 [#allocation2], 4
      %s20 = int_to_ptr.vmem [resolvable:$true] %s19
      %25 = dma.hbm_to_vmem [thread:$0]  %s18, 256, %s20, [#allocation3], 128, 128, 8
    $region5: #{tpu_custom_call.1} parent=1 // pred_fallthru
      _
    // Predicated region
    $region6: #{tpu_custom_call.1} parent=1 // pred_check
      _
    $region7: #{tpu_custom_call.1} parent=1 // pred_check_branch
      %27 = sbr.rel (0) target = $region9
    $region8: #{tpu_custom_call.1} parent=1 // pred_region
      %s28 = sadd.s32 0, 0
      %s29 = smul.u32 2, %s28
      %s31 = ssub.s32 256, 256
      %32 = vsyncadd [#allocation6], %s31
      %s33 = smul.addr %s29, 128
      %s34 = scalar_lea.hbm %s1, %s33
      %s35 = sshll.u32 [#allocation5], 4
      %s36 = int_to_ptr.vmem [resolvable:$true] %s35
      %41 = dma.hbm_to_vmem [thread:$0]  %s34, 256, %s36, [#allocation6], 128, 128, 8
    $region9: #{tpu_custom_call.1} parent=1 // pred_fallthru
      _
    // Predicated region
    $region10: #{tpu_custom_call.1} parent=1 // pred_check
      _
    $region11: #{tpu_custom_call.1} parent=1 // pred_check_branch
      %43 = sbr.rel (0) target = $region13
    $region12: #{tpu_custom_call.1} parent=1 // pred_region
      %44 = dma.done [#allocation3], 256
    $region13: #{tpu_custom_call.1} parent=1 // pred_fallthru
      _
    // Predicated region
    $region14: #{tpu_custom_call.1} parent=1 // pred_check
      _
    $region15: #{tpu_custom_call.1} parent=1 // pred_check_branch
      %46 = sbr.rel (0) target = $region17
    $region16: #{tpu_custom_call.1} parent=1 // pred_region
      %47 = dma.done [#allocation6], 256
    $region17: #{tpu_custom_call.1} parent=1 // pred_fallthru
      _
    %s48 = sadd.s32 0, 0
    %s49 = smul.u32 2, %s48
    %s50 = sadd.s32 0, 0
    %s51 = smul.u32 2, %s50
    %p52 = scmp.eq.s32.totalorder 0, 0
    // Predicated region
    $region18: #{tpu_custom_call.1} parent=1 // pred_check
      %p53 = pneg %p52
    $region19: #{tpu_custom_call.1} parent=1 // pred_check_branch
      %55 = sbr.rel (%p53) target = $region21
    $region20: #{tpu_custom_call.1} parent=1 // pred_region
      %56 = vst [vmem:[#allocation7] sm:$0xff] 0.0
      %57 = vst [vmem:[#allocation7 + $0x8] sm:$0xff] 0.0
      %58 = vst [vmem:[#allocation7 + $0x10] sm:$0xff] 0.0
      %59 = vst [vmem:[#allocation7 + $0x18] sm:$0xff] 0.0
    $region21: #{tpu_custom_call.1} parent=1 // pred_fallthru
      _
    %v60 = vld [vmem:[#allocation2] sm:$0xff]
    %v61 = vld [vmem:[#allocation2 + $0x8] sm:$0xff]
    %v62 = vld [vmem:[#allocation5] sm:$0xff]
    %v63 = vld [vmem:[#allocation5 + $0x8] sm:$0xff]
    %v64 = vsub.f32 1.0, %v62
    %v65 = vsub.f32 1.0, %v63
    %v66 = vmul.f32 %v60, %v62
    %v67 = vmul.f32 %v61, %v63
    %v68 = vlog2.pop %v60
    %v69 = vmul.f32 %v68, 0.6931472
    %v70 = vlog2.pop %v61
    %v71 = vmul.f32 %v70, 0.6931472
    %v72 = vmax.f32 %v69, -100.0
    %v73 = vmax.f32 %v71, -100.0
    %v74 = vsub.f32 1.0, %v60
    %v75 = vsub.f32 1.0, %v61
    %v76 = vlog2.pop %v74
    %v77 = vmul.f32 %v76, 0.6931472
    %v78 = vlog2.pop %v75
    %v79 = vmul.f32 %v78, 0.6931472
    %v80 = vmax.f32 %v77, -100.0
    %v81 = vmax.f32 %v79, -100.0
    %v82 = vmul.f32 %v62, %v72
    %v83 = vmul.f32 %v63, %v73
    %v84 = vmul.f32 %v64, %v80
    %v85 = vmul.f32 %v65, %v81
    %v86 = vadd.f32 %v82, %v84
    %v87 = vadd.f32 %v83, %v85
    %v88 = vld [vmem:[#allocation7] sm:$0xff]
    %v89 = vadd.f32 %v66, %v67
    %v90 = vadd.f32 %v88, %v89
    %91 = vst [vmem:[#allocation7] sm:$0xff] %v90
    %s92 = scalar_lea.vmem [#allocation7], 8
    %v93 = vld [vmem:[%s92] sm:$0xff]
    %v94 = vadd.f32 %v60, %v61
    %v95 = vadd.f32 %v93, %v94
    %96 = vst [vmem:[%s92] sm:$0xff] %v95
    %s97 = scalar_lea.vmem [#allocation7], 16
    %v98 = vld [vmem:[%s97] sm:$0xff]
    %v99 = vadd.f32 %v62, %v63
    %v100 = vadd.f32 %v98, %v99
    %101 = vst [vmem:[%s97] sm:$0xff] %v100
    %s102 = scalar_lea.vmem [#allocation7], 24
    %v103 = vld [vmem:[%s102] sm:$0xff]
    %v104 = vadd.f32 %v86, %v87
    %v105 = vadd.f32 %v103, %v104
    %106 = vst [vmem:[%s102] sm:$0xff] %v105
    // Predicated region
    $region22: #{tpu_custom_call.1} parent=1 // pred_check
      _
    $region23: #{tpu_custom_call.1} parent=1 // pred_check_branch
      %108 = sbr.rel (0) target = $region25
    $region24: #{tpu_custom_call.1} parent=1 // pred_region
      %s110 = ssub.s32 512, 512
      %111 = vsyncadd [#allocation4], %s110
      %s112 = sshll.u32 [#allocation7], 4
      %s113 = int_to_ptr.vmem [resolvable:$true] %s112
      %118 = dma.vmem_to_hbm [thread:$0]  %s113, 512, %s2, [#allocation4], 128, 128, 8
    $region25: #{tpu_custom_call.1} parent=1 // pred_fallthru
      _
    // Predicated region
    $region26: #{tpu_custom_call.1} parent=1 // pred_check
      _
    $region27: #{tpu_custom_call.1} parent=1 // pred_check_branch
      %120 = sbr.rel (0) target = $region29
    $region28: #{tpu_custom_call.1} parent=1 // pred_region
      %121 = dma.done [#allocation4], 512
    $region29: #{tpu_custom_call.1} parent=1 // pred_fallthru
      _
    %122 = vsyncpa [#allocation3], 1
    %123 = vsyncpa [#allocation6], 1
    %124 = vsyncpa [#allocation4], 1

</llo_original>
